<compile_context>
chip_gen: v5e
topology: v5e:2x2
jax: 0.10.0
libtpu: 0.0.40
codegen_flags: <defaults>
</compile_context>

<pallas_src>
import numpy as np
import jax
import jax.numpy as jnp
from jax.experimental import pallas as pl
from jax.experimental.pallas import tpu as pltpu

_TARGET_BLOCK_ELEMS = 256 * 1024  # ~1 MiB of f32 per x block


# ----------------------------- kernels (3-D path) -----------------------------

def _ps3d_kernel_real(x_ref, cw_ref, sw_ref, yr_ref, yi_ref):
    """Real x:  y = x * exp(i*phi)  ->  yr = x*cos, yi = x*sin."""
    x = x_ref[...]                      # [bt, tr, tn]
    c = cw_ref[...][None, :, :]         # [1,  tr, tn]  (in-vreg broadcast)
    s = sw_ref[...][None, :, :]
    yr_ref[...] = x * c
    yi_ref[...] = x * s


def _ps3d_kernel_complex(xr_ref, xi_ref, cw_ref, sw_ref, yr_ref, yi_ref):
    """Complex x:  (xr + i*xi) * (cos + i*sin)."""
    xr = xr_ref[...]
    xi = xi_ref[...]
    c = cw_ref[...][None, :, :]
    s = sw_ref[...][None, :, :]
    yr_ref[...] = xr * c - xi * s
    yi_ref[...] = xr * s + xi * c


# ----------------------------- kernels (2-D path) -----------------------------

def _ps2d_kernel_real(x_ref, cw_ref, sw_ref, yr_ref, yi_ref):
    x = x_ref[...]                      # [tm, tn]
    c = cw_ref[...]                     # [1,  tn]  (sublane broadcast)
    s = sw_ref[...]
    yr_ref[...] = x * c
    yi_ref[...] = x * s


def _ps2d_kernel_complex(xr_ref, xi_ref, cw_ref, sw_ref, yr_ref, yi_ref):
    xr = xr_ref[...]
    xi = xi_ref[...]
    c = cw_ref[...]
    s = sw_ref[...]
    yr_ref[...] = xr * c - xi * s
    yi_ref[...] = xr * s + xi * c


# ----------------------------- tiling helpers ---------------------------------

def _pick_tile(dim, align, cap):
    """Largest multiple of `align` dividing `dim`, at most `cap`.
    If dim is not a multiple of `align`, use the full dim (full-extent block)."""
    if dim % align != 0:
        return dim
    cap = max(align, min(dim, cap))
    t = (cap // align) * align
    while t > align and dim % t != 0:
        t -= align
    return t


def _largest_divisor_leq(n, cap):
    cap = max(1, min(n, cap))
    for d in range(cap, 0, -1):
        if n % d == 0:
            return d
    return 1


# ----------------------------- pallas wrappers ---------------------------------

def _ps_pallas_3d(planes, cw, sw):
    """planes: (xr,) for real x or (xr, xi) for complex x, each f32[B, R, N].
    cw/sw: f32[R, N] (cos/sin of phases). Returns (yr, yi) f32[B, R, N]."""
    B, R, N = planes[0].shape

    tn = _pick_tile(N, 128, 2048)
    tr = _pick_tile(R, 8, max(8, _TARGET_BLOCK_ELEMS // tn))
    bt = _largest_divisor_leq(B, max(1, _TARGET_BLOCK_ELEMS // (tr * tn)))

    # v7x has 2 TensorCores per chip: make sure the grid has >= 2 steps.
    if (R // tr) * (N // tn) * (B // bt) == 1:
        if R % 16 == 0:
            tr = R // 2
        elif N % 256 == 0:
            tn = N // 2
        elif B >= 2:
            bt = _largest_divisor_leq(B, B // 2)

    # Batch is the innermost grid axis: the weight block index does not change
    # across it, so its (tiny) DMA is not re-issued per batch step.
    grid = (R // tr, N // tn, B // bt)

    x_spec = pl.BlockSpec((bt, tr, tn), lambda r, c, b: (b, r, c))
    w_spec = pl.BlockSpec((tr, tn), lambda r, c, b: (r, c))

    n_planes = len(planes)
    kernel = _ps3d_kernel_real if n_planes == 1 else _ps3d_kernel_complex

    total = B * R * N
    cost = pl.CostEstimate(
        flops=(2 if n_planes == 1 else 6) * total,
        transcendentals=0,
        bytes_accessed=4 * ((n_planes + 2) * total + 2 * R * N),
    )

    return pl.pallas_call(
        kernel,
        out_shape=(
            jax.ShapeDtypeStruct((B, R, N), jnp.float32),
            jax.ShapeDtypeStruct((B, R, N), jnp.float32),
        ),
        grid_spec=pltpu.PrefetchScalarGridSpec(
            num_scalar_prefetch=0,
            grid=grid,
            in_specs=[x_spec] * n_planes + [w_spec, w_spec],
            out_specs=(x_spec, x_spec),
        ),
        compiler_params=pltpu.CompilerParams(
            dimension_semantics=("parallel", "parallel", "parallel"),
            vmem_limit_bytes=32 * 1024 * 1024,
        ),
        cost_estimate=cost,
    )(*planes, cw, sw)


def _ps_pallas_2d(planes, cw, sw):
    """planes: 1 or 2 planes of f32[M, N]; cw/sw: f32[1, N] (single weight row
    broadcast over all M rows). Returns (yr, yi) f32[M, N]."""
    M, N = planes[0].shape

    tn = _pick_tile(N, 128, 2048)
    tm = _pick_tile(M, 8, max(8, _TARGET_BLOCK_ELEMS // tn))

    # Ensure >= 2 grid steps when possible (megacore / v7x dual-TC).
    if (M // tm) * (N // tn) == 1:
        if M % 16 == 0:
            tm = M // 2
        elif N % 256 == 0:
            tn = N // 2

    # M is the innermost grid axis so the tiny weight tile's block index is
    # constant across it.
    grid = (N // tn, M // tm)

    x_spec = pl.BlockSpec((tm, tn), lambda j, i: (i, j))
    w_spec = pl.BlockSpec((1, tn), lambda j, i: (0, j))

    n_planes = len(planes)
    kernel = _ps2d_kernel_real if n_planes == 1 else _ps2d_kernel_complex

    total = M * N
    cost = pl.CostEstimate(
        flops=(2 if n_planes == 1 else 6) * total,
        transcendentals=0,
        bytes_accessed=4 * ((n_planes + 2) * total + 2 * N),
    )

    return pl.pallas_call(
        kernel,
        out_shape=(
            jax.ShapeDtypeStruct((M, N), jnp.float32),
            jax.ShapeDtypeStruct((M, N), jnp.float32),
        ),
        grid_spec=pltpu.PrefetchScalarGridSpec(
            num_scalar_prefetch=0,
            grid=grid,
            in_specs=[x_spec] * n_planes + [w_spec, w_spec],
            out_specs=(x_spec, x_spec),
        ),
        compiler_params=pltpu.CompilerParams(
            dimension_semantics=("parallel", "parallel"),
            vmem_limit_bytes=32 * 1024 * 1024,
        ),
        cost_estimate=cost,
    )(*planes, cw, sw)


# ----------------------------- public forward ----------------------------------

def super_batched_ps_forward(x, weight, share_uv="global"):
    """Forward pass of SuperBatchedPSLayer: y = x.astype(complex) * exp(1j*weight)
    with numpy-style broadcasting of weight against x."""
    share_uv = share_uv.lower()
    assert share_uv in {"global", "row", "col", "none"}

    x = jnp.asarray(x)
    phi = jnp.asarray(weight, dtype=jnp.float32)
    if phi.ndim == 0:
        phi = phi.reshape(1)

    out_shape = jnp.broadcast_shapes(x.shape, phi.shape)
    if x.shape != out_shape:
        x = jnp.broadcast_to(x, out_shape)  # no-op in the common case

    # Trailing dims covered by the weight; everything in front is pure batch.
    k = phi.ndim
    w_shape = out_shape[-k:]
    N = out_shape[-1]
    R = int(np.prod(w_shape[:-1])) if len(w_shape) > 1 else 1
    B = int(np.prod(out_shape[:-k])) if len(out_shape) > k else 1

    # cos/sin of the *small* phase tensor, plain JAX (<= gy*gx*n_wg elements).
    phi_small = jnp.broadcast_to(phi, w_shape).reshape(R, N)
    cw = jnp.cos(phi_small)
    sw = jnp.sin(phi_small)

    is_cplx = jnp.iscomplexobj(x)

    if R == 1:
        # Single weight row ('global' and friends): 2-D layout [M, N] keeps the
        # sublane dim dense instead of a size-1 middle dim padded 1 -> 8.
        M = B
        if is_cplx:
            xc = x.astype(jnp.complex64)
            planes = (jnp.real(xc).reshape(M, N), jnp.imag(xc).reshape(M, N))
        else:
            planes = (x.astype(jnp.float32).reshape(M, N),)
        yr, yi = _ps_pallas_2d(planes, cw, sw)
    else:
        # Fold a small batch factor into the row dim so the sublane dim is dense
        # (weight replication stays tiny: factor <= 8).
        f = 1
        if R % 8 != 0 and B > 1:
            for cand in range(2, 9):
                if (R * cand) % 8 == 0 and B % cand == 0:
                    f = cand
                    break
        if f > 1:
            B, R = B // f, R * f
            cw = jnp.tile(cw, (f, 1))
            sw = jnp.tile(sw, (f, 1))

        if is_cplx:
            xc = x.astype(jnp.complex64)
            planes = (jnp.real(xc).reshape(B, R, N),
                      jnp.imag(xc).reshape(B, R, N))
        else:
            # Real input (common path): imag(x) == 0, skip the all-zeros plane.
            planes = (x.astype(jnp.float32).reshape(B, R, N),)
        yr, yi = _ps_pallas_3d(planes, cw, sw)

    return jax.lax.complex(yr, yi).reshape(out_shape)


def init_weight(key, share_uv, grid_dim_x, grid_dim_y, n_waveguides):
    """Mirrors reset_parameters(alg='uniform'): uniform(-pi/2, pi)."""
    if share_uv == "global":
        shape = (n_waveguides,)
    elif share_uv == "row":
        shape = (grid_dim_y, n_waveguides)
    elif share_uv == "col":
        shape = (grid_dim_x, n_waveguides)
    elif share_uv == "none":
        shape = (grid_dim_y, grid_dim_x, n_waveguides)
    else:
        raise ValueError(share_uv)
    return jax.random.uniform(
        key, shape, dtype=jnp.float32, minval=-np.pi / 2, maxval=np.pi
    )


def _reference(x, weight):
    xc = jnp.asarray(x).astype(jnp.complex64)
    w = jnp.exp(1j * jnp.asarray(weight, dtype=jnp.float32)).astype(jnp.complex64)
    return xc * w


if __name__ == "__main__":
    key = jax.random.PRNGKey(0)
    k_x, k_x2, k_g, k_r, k_c, k_n = jax.random.split(key, 6)

    batch, grid_dim_y, grid_dim_x, n_waveguides = 2, 4, 4, 128
    # layout: x is [batch, grid_dim_y, grid_dim_x, n_waveguides]
    x = jax.random.normal(
        k_x, (batch, grid_dim_y, grid_dim_x, n_waveguides), dtype=jnp.float32
    )
    x2 = jax.random.normal(
        k_x2, (batch, grid_dim_y, grid_dim_x, n_waveguides), dtype=jnp.float32
    )
    x_cplx = jax.lax.complex(x, x2)

    weight_keys = {"global": k_g, "row": k_r, "col": k_c, "none": k_n}

    ok = True
    for share_uv, wkey in weight_keys.items():
        w = init_weight(wkey, share_uv, grid_dim_x, grid_dim_y, n_waveguides)

        # Real-input path.
        y = jax.block_until_ready(super_batched_ps_forward(x, w, share_uv=share_uv))
        y_ref = _reference(x, w)
        if y.shape != y_ref.shape or y.dtype != jnp.complex64:
            ok = False
        if not jnp.allclose(y, y_ref, atol=1e-5, rtol=1e-5):
            ok = False

        # Complex-input path.
        yc = jax.block_until_ready(
            super_batched_ps_forward(x_cplx, w, share_uv=share_uv)
        )
        yc_ref = _reference(x_cplx, w)
        if yc.shape != yc_ref.shape or yc.dtype != jnp.complex64:
            ok = False
        if not jnp.allclose(yc, yc_ref, atol=1e-5, rtol=1e-5):
            ok = False

    if ok:
        print("KERNEL_OK")
    else:
        print("KERNEL_MISMATCH")
</pallas_src>

<mosaic_0001>
module attributes {stable_mosaic.version = 11 : i64} {
  func.func @_ps2d_kernel_real(%arg0: i32, %arg1: i32, %arg2: memref<16x128xf32, #tpu.memory_space<vmem>>, %arg3: memref<1x128xf32, #tpu.memory_space<vmem>>, %arg4: memref<1x128xf32, #tpu.memory_space<vmem>>, %arg5: memref<16x128xf32, #tpu.memory_space<vmem>>, %arg6: memref<16x128xf32, #tpu.memory_space<vmem>>) attributes {dimension_semantics = [#tpu.dimension_semantics<parallel>, #tpu.dimension_semantics<parallel>], iteration_bounds = array<i64: 1, 2>, scalar_prefetch = 0 : i64, scratch_operands = 0 : i64, tpu.core_type = #tpu.core_type<tc>, window_params = [{transform_indices = @transform_0, window_bounds = array<i64: 16, 128>}, {transform_indices = @transform_1, window_bounds = array<i64: 1, 128>}, {transform_indices = @transform_2, window_bounds = array<i64: 1, 128>}, {transform_indices = @transform_3, window_bounds = array<i64: 16, 128>}, {transform_indices = @transform_4, window_bounds = array<i64: 16, 128>}]} {
    %c0 = arith.constant 0 : index
    %c0_0 = arith.constant 0 : index
    %0 = vector.load %arg2[%c0, %c0_0] : memref<16x128xf32, #tpu.memory_space<vmem>>, vector<16x128xf32>
    %c0_1 = arith.constant 0 : index
    %c0_2 = arith.constant 0 : index
    %1 = vector.load %arg3[%c0_1, %c0_2] : memref<1x128xf32, #tpu.memory_space<vmem>>, vector<1x128xf32>
    %c0_3 = arith.constant 0 : index
    %c0_4 = arith.constant 0 : index
    %2 = vector.load %arg4[%c0_3, %c0_4] : memref<1x128xf32, #tpu.memory_space<vmem>>, vector<1x128xf32>
    %3 = vector.broadcast %1 : vector<1x128xf32> to vector<16x128xf32>
    %4 = arith.mulf %0, %3 : vector<16x128xf32>
    %c0_5 = arith.constant 0 : index
    %c0_6 = arith.constant 0 : index
    %5 = vector.load %arg5[%c0_5, %c0_6] : memref<16x128xf32, #tpu.memory_space<vmem>>, vector<16x128xf32>
    tpu.vector_store %arg5[%c0_5, %c0_6], %4 {strides = array<i32>} : memref<16x128xf32, #tpu.memory_space<vmem>>, vector<16x128xf32>,
    %6 = vector.broadcast %2 : vector<1x128xf32> to vector<16x128xf32>
    %7 = arith.mulf %0, %6 : vector<16x128xf32>
    %c0_7 = arith.constant 0 : index
    %c0_8 = arith.constant 0 : index
    %8 = vector.load %arg6[%c0_7, %c0_8] : memref<16x128xf32, #tpu.memory_space<vmem>>, vector<16x128xf32>
    tpu.vector_store %arg6[%c0_7, %c0_8], %7 {strides = array<i32>} : memref<16x128xf32, #tpu.memory_space<vmem>>, vector<16x128xf32>,
    return
  }
  func.func @transform_0(%arg0: i32, %arg1: i32) -> (i32, i32) {
    %c0_i32 = arith.constant 0 : i32
    return %arg1, %arg0 : i32, i32
  }
  func.func @transform_1(%arg0: i32, %arg1: i32) -> (i32, i32) {
    %c0_i32 = arith.constant 0 : i32
    %c0_i32_0 = arith.constant 0 : i32
    return %c0_i32, %arg0 : i32, i32
  }
  func.func @transform_2(%arg0: i32, %arg1: i32) -> (i32, i32) {
    %c0_i32 = arith.constant 0 : i32
    %c0_i32_0 = arith.constant 0 : i32
    return %c0_i32, %arg0 : i32, i32
  }
  func.func @transform_3(%arg0: i32, %arg1: i32) -> (i32, i32) {
    %c0_i32 = arith.constant 0 : i32
    return %arg1, %arg0 : i32, i32
  }
  func.func @transform_4(%arg0: i32, %arg1: i32) -> (i32, i32) {
    %c0_i32 = arith.constant 0 : i32
    return %arg1, %arg0 : i32, i32
  }
}

</mosaic_0001>

<llo_original>
// kernel: tpu_custom_call.1
$region0: #{tpu_custom_call.1}
  #allocation0 [shape = 'u32[]', space=smem, size = 0x4, offset = 0x4, fixed_abs, tag = 'smem constant byte address 0x4 - core index']
  #allocation1 [shape = 'u32[72,128]{1,0:T(1,128)}', space=vmem, size = 0x9000, scoped, tag = 'internal scratch']
  %s0 = inlined_call_operand.hbm [shape: f32[32,128], index: 0, kind: input, shape index: {}]
  %s1 = inlined_call_operand.hbm [shape: f32[1,128], index: 1, kind: input, shape index: {}]
  %s2 = inlined_call_operand.vmem [shape: f32[1,128], index: 2, kind: input, shape index: {}]
  %s3 = inlined_call_operand.hbm [shape: f32[32,128], index: 3, kind: output, shape index: {0}]
  %s4 = inlined_call_operand.hbm [shape: f32[32,128], index: 4, kind: output, shape index: {1}]
  %5 = xla_tuple %s3, %s4
  %s6 = sld [smem:[#allocation0]]
  $region61: #{tpu_custom_call.1} parent=0
    _
  %s8 = ssub.s32 1, %s6
  %s9 = scalar_select 0, %s8, %s6
  $region1: #{tpu_custom_call.1} parent=0
    #allocation2 [shape = 'u8[16384]{0}', space=vmem, size = 0x4000, scoped, tag = 'input window, operand 0']
    #allocation3 [shape = 's32[2]{0}', space=sflag, size = 0x8, scoped, tag = 'scoped memory for tpu_custom_call.1']
    #allocation4 [shape = 's32[2]{0}', space=sflag, size = 0x8, scoped, tag = 'scoped memory for tpu_custom_call.1']
    #allocation5 [shape = 'u8[512]{0}', space=vmem, size = 0x400, scoped, tag = 'input window, operand 1, single buffered']
    #allocation6 [shape = 's32[1]{0}', space=sflag, size = 0x4, scoped, tag = 'scoped memory for tpu_custom_call.1']
    #allocation7 [shape = 'u8[16384]{0}', space=vmem, size = 0x4000, scoped, tag = 'output window, operand 0']
    #allocation8 [shape = 'u8[16384]{0}', space=vmem, size = 0x4000, scoped, tag = 'output window, operand 1']
    #allocation9 [shape = 's32[2]{0}', space=sflag, size = 0x8, scoped, tag = 'scoped memory for tpu_custom_call.1']
    %10 = vsyncpa [#allocation3], 0
    %s11 = scalar_lea.sflag [#allocation3], 1
    %12 = vsyncpa %s11, 0
    %13 = vsyncpa [#allocation6], 0
    %14 = vsyncpa [#allocation4], 0
    %s15 = scalar_lea.sflag [#allocation4], 1
    %16 = vsyncpa %s15, 0
    %17 = vsyncpa [#allocation9], 0
    %s18 = scalar_lea.sflag [#allocation9], 1
    %19 = vsyncpa %s18, 0
    loop: start=0, step=1, limit=4
    $region2: #{tpu_custom_call.1} parent=1 // loop_pre_header
      _
    $region3: #{tpu_custom_call.1} parent=1 // loop_header
      %s21 = sphi 0, %s25
      %p22 = scmp.ge.s32.totalorder %s21, 4
      %s28 = sphi 0, %s40
      %s29 = sphi 0, %s36
      %s30 = sphi 0, %s28
      %s31 = sphi 0, %s29
      %s32 = sphi 0, %s30
      %s33 = sphi 0, %s31
      %s45 = sphi 0, %s47
      %s48 = sphi 0, %s45
      %s49 = sphi 0, %s48
      %s65 = sphi 0, %s49
      %s71 = sphi 0, %s73
      %s74 = sphi 0, %s71
      %s75 = sphi 0, %s74
      %s91 = sphi 0, %s75
      %s97 = sphi 0, %s99
      %s100 = sphi 0, %s97
      %s101 = sphi 0, %s100
      %s117 = sphi 0, %s101
      %s125 = sphi 0, %s127
      %s128 = sphi 0, %s125
      %s129 = sphi 0, %s128
      %s145 = sphi 0, %s129
      %s153 = sphi 0, %s155
      %s156 = sphi 0, %s153
      %s157 = sphi 0, %s156
      %s173 = sphi 0, %s157
    $region4: #{tpu_custom_call.1} parent=1 // loop_header_branch
      %24 = sbr.rel (%p22) target = $region8
    $region5: #{tpu_custom_call.1} parent=1 // loop_body
      %s26 = ssub.s32 %s21, 1
      %s27 = ssub.s32 %s21, 2
      %s34 = sadd.s32 1, %s29
      %p35 = scmp.ge.s32.totalorder %s34, 2
      %s36 = scalar_select %p35, 0, %s34
      %s37 = sadd.s32 1, %s28
      %s38 = scalar_select %p35, %s37, %s28
      %p39 = scmp.ge.s32.totalorder %s38, 1
      %s40 = scalar_select %p39, 0, %s38
      %s41 = ssub.s32 %s29, %s36
      %s42 = ssub.s32 %s28, %s40
      %s43 = sor.u32 %s41, %s42
      %p44 = scmp.eq.s32.totalorder %s43, 0
      %s46 = sadd.s32 %s45, 1
      %s47 = scalar_select %p44, %s45, %s46
      %p50 = pneg %p44
      %p51 = scmp.eq.s32.totalorder %s21, 1
      %p52 = por %p50, %p51
      %p53 = scmp.ne.s32.totalorder %s45, %s48
      %p54 = scmp.eq.s32.totalorder %s21, 0
      %p55 = por %p53, %p54
      %p56 = scmp.ne.s32.totalorder %s45, %s48
      %p57 = scmp.eq.s32.totalorder %s26, 1
      %p58 = por %p56, %p57
      %p59 = scmp.ne.s32.totalorder %s48, %s49
      %p60 = scmp.eq.s32.totalorder %s26, 0
      %p61 = por %p59, %p60
      %p62 = scmp.ne.s32.totalorder %s48, %s49
      %p63 = scmp.eq.s32.totalorder %s27, 1
      %p64 = por %p62, %p63
      %p66 = scmp.ne.s32.totalorder %s49, %s65
      %p67 = scmp.eq.s32.totalorder %s27, 0
      %p68 = por %p66, %p67
      %s69 = ssub.s32 %s28, %s40
      %p70 = scmp.eq.s32.totalorder %s69, 0
      %s72 = sadd.s32 %s71, 1
      %s73 = scalar_select %p70, %s71, %s72
      %p76 = pneg %p70
      %p77 = scmp.eq.s32.totalorder %s21, 1
      %p78 = por %p76, %p77
      %p79 = scmp.ne.s32.totalorder %s71, %s74
      %p80 = scmp.eq.s32.totalorder %s21, 0
      %p81 = por %p79, %p80
      %p82 = scmp.ne.s32.totalorder %s71, %s74
      %p83 = scmp.eq.s32.totalorder %s26, 1
      %p84 = por %p82, %p83
      %p85 = scmp.ne.s32.totalorder %s74, %s75
      %p86 = scmp.eq.s32.totalorder %s26, 0
      %p87 = por %p85, %p86
      %p88 = scmp.ne.s32.totalorder %s74, %s75
      %p89 = scmp.eq.s32.totalorder %s27, 1
      %p90 = por %p88, %p89
      %p92 = scmp.ne.s32.totalorder %s75, %s91
      %p93 = scmp.eq.s32.totalorder %s27, 0
      %p94 = por %p92, %p93
      %s95 = ssub.s32 %s28, %s40
      %p96 = scmp.eq.s32.totalorder %s95, 0
      %s98 = sadd.s32 %s97, 1
      %s99 = scalar_select %p96, %s97, %s98
      %p102 = pneg %p96
      %p103 = scmp.eq.s32.totalorder %s21, 1
      %p104 = por %p102, %p103
      %p105 = scmp.ne.s32.totalorder %s97, %s100
      %p106 = scmp.eq.s32.totalorder %s21, 0
      %p107 = por %p105, %p106
      %p108 = scmp.ne.s32.totalorder %s97, %s100
      %p109 = scmp.eq.s32.totalorder %s26, 1
      %p110 = por %p108, %p109
      %p111 = scmp.ne.s32.totalorder %s100, %s101
      %p112 = scmp.eq.s32.totalorder %s26, 0
      %p113 = por %p111, %p112
      %p114 = scmp.ne.s32.totalorder %s100, %s101
      %p115 = scmp.eq.s32.totalorder %s27, 1
      %p116 = por %p114, %p115
      %p118 = scmp.ne.s32.totalorder %s101, %s117
      %p119 = scmp.eq.s32.totalorder %s27, 0
      %p120 = por %p118, %p119
      %s121 = ssub.s32 %s29, %s36
      %s122 = ssub.s32 %s28, %s40
      %s123 = sor.u32 %s121, %s122
      %p124 = scmp.eq.s32.totalorder %s123, 0
      %s126 = sadd.s32 %s125, 1
      %s127 = scalar_select %p124, %s125, %s126
      %p130 = pneg %p124
      %p131 = scmp.eq.s32.totalorder %s21, 1
      %p132 = por %p130, %p131
      %p133 = scmp.ne.s32.totalorder %s125, %s128
      %p134 = scmp.eq.s32.totalorder %s21, 0
      %p135 = por %p133, %p134
      %p136 = scmp.ne.s32.totalorder %s125, %s128
      %p137 = scmp.eq.s32.totalorder %s26, 1
      %p138 = por %p136, %p137
      %p139 = scmp.ne.s32.totalorder %s128, %s129
      %p140 = scmp.eq.s32.totalorder %s26, 0
      %p141 = por %p139, %p140
      %p142 = scmp.ne.s32.totalorder %s128, %s129
      %p143 = scmp.eq.s32.totalorder %s27, 1
      %p144 = por %p142, %p143
      %p146 = scmp.ne.s32.totalorder %s129, %s145
      %p147 = scmp.eq.s32.totalorder %s27, 0
      %p148 = por %p146, %p147
      %s149 = ssub.s32 %s29, %s36
      %s150 = ssub.s32 %s28, %s40
      %s151 = sor.u32 %s149, %s150
      %p152 = scmp.eq.s32.totalorder %s151, 0
      %s154 = sadd.s32 %s153, 1
      %s155 = scalar_select %p152, %s153, %s154
      %p158 = pneg %p152
      %p159 = scmp.eq.s32.totalorder %s21, 1
      %p160 = por %p158, %p159
      %p161 = scmp.ne.s32.totalorder %s153, %s156
      %p162 = scmp.eq.s32.totalorder %s21, 0
      %p163 = por %p161, %p162
      %p164 = scmp.ne.s32.totalorder %s153, %s156
      %p165 = scmp.eq.s32.totalorder %s26, 1
      %p166 = por %p164, %p165
      %p167 = scmp.ne.s32.totalorder %s156, %s157
      %p168 = scmp.eq.s32.totalorder %s26, 0
      %p169 = por %p167, %p168
      %p170 = scmp.ne.s32.totalorder %s156, %s157
      %p171 = scmp.eq.s32.totalorder %s27, 1
      %p172 = por %p170, %p171
      %p174 = scmp.ne.s32.totalorder %s157, %s173
      %p175 = scmp.eq.s32.totalorder %s27, 0
      %p176 = por %p174, %p175
      %p177 = scmp.le.s32.totalorder 1, %s21
      %p178 = scmp.lt.s32.totalorder %s21, 3
      %p179 = pnand %p177, %p178
      %p180 = pneg %p179
      // Predicated region
      $region9: #{tpu_custom_call.1} parent=5 // pred_check
        _
      $region10: #{tpu_custom_call.1} parent=5 // pred_check_branch
        %182 = sbr.rel (%p179) target = $region12
      $region11: #{tpu_custom_call.1} parent=5 // pred_region
        %s183 = ssub.s32 %s21, 1
        // Predicated region
        $region13: #{tpu_custom_call.1} parent=11 // pred_check
          %p184 = pneg %p87
        $region14: #{tpu_custom_call.1} parent=11 // pred_check_branch
          %186 = sbr.rel (%p184) target = $region16
        $region15: #{tpu_custom_call.1} parent=11 // pred_region
          %188 = vsyncadd [#allocation6], 0
          %s189 = scalar_lea.hbm %s1, %s30
          %s191 = sshll.u32 %s189, 4
          %s192 = int_to_ptr.hbm [resolvable:$true] %s191
          %s193 = sshll.u32 [#allocation5], 4
          %s194 = int_to_ptr.vmem [resolvable:$true] %s193
          %196 = dma.hbm_to_vmem [thread:$0]  %s192, 16, %s194, [#allocation6]
        $region16: #{tpu_custom_call.1} parent=11 // pred_fallthru
          _
        // Predicated region
        $region17: #{tpu_custom_call.1} parent=11 // pred_check
          %p197 = pneg %p113
        $region18: #{tpu_custom_call.1} parent=11 // pred_check_branch
          %199 = sbr.rel (%p197) target = $region20
        $region19: #{tpu_custom_call.1} parent=11 // pred_region
          %p200 = scmp.lt.s32.totalorder %s30, 0
          %s201 = scalar_select %p200, %s30, 0
          %s202 = scalar_lea.vmem %s2, %s201
        $region20: #{tpu_custom_call.1} parent=11 // pred_fallthru
          _
      $region12: #{tpu_custom_call.1} parent=5 // pred_fallthru
        _
      %p203 = scmp.lt.s32.totalorder %s21, 2
      // Predicated region
      $region21: #{tpu_custom_call.1} parent=5 // pred_check
        %p204 = pneg %p203
      $region22: #{tpu_custom_call.1} parent=5 // pred_check_branch
        %206 = sbr.rel (%p204) target = $region24
      $region23: #{tpu_custom_call.1} parent=5 // pred_region
        // Predicated region
        $region25: #{tpu_custom_call.1} parent=23 // pred_check
          %p207 = pneg %p55
        $region26: #{tpu_custom_call.1} parent=23 // pred_check_branch
          %209 = sbr.rel (%p207) target = $region28
        $region27: #{tpu_custom_call.1} parent=23 // pred_region
          %s210 = sand.u32 %s45, 1
          %s211 = scalar_lea.sflag [#allocation3], %s210
          %s212 = sand.u32 %s45, 1
          %s213 = smul.addr %s212, 16
          %s214 = scalar_lea.vmem [#allocation2], %s213
          %s215 = smul.u32 2, %s29
          %217 = vsyncadd %s211, 0
          %s218 = sadd.s32 %s28, %s215
          %s219 = smul.addr %s218, 8
          %s220 = scalar_lea.hbm %s0, %s219
          %s221 = sshll.u32 %s220, 4
          %s222 = int_to_ptr.hbm [resolvable:$true] %s221
          %s223 = sshll.u32 %s214, 4
          %s224 = int_to_ptr.vmem [resolvable:$true] %s223
          %229 = dma.hbm_to_vmem [thread:$0]  %s222, 256, %s224, %s211, 128, 128, 8
        $region28: #{tpu_custom_call.1} parent=23 // pred_fallthru
          _
      $region24: #{tpu_custom_call.1} parent=5 // pred_fallthru
        _
      %p230 = scmp.le.s32.totalorder 1, %s21
      %p231 = scmp.lt.s32.totalorder %s21, 3
      %p232 = pnand %p230, %p231
      %p233 = pneg %p232
      // Predicated region
      $region29: #{tpu_custom_call.1} parent=5 // pred_check
        _
      $region30: #{tpu_custom_call.1} parent=5 // pred_check_branch
        %235 = sbr.rel (%p232) target = $region32
      $region31: #{tpu_custom_call.1} parent=5 // pred_region
        %s236 = ssub.s32 %s21, 1
        %s237 = sand.u32 %s48, 1
        %s238 = scalar_lea.sflag [#allocation3], %s237
        %s239 = sand.u32 %s48, 1
        %s240 = smul.addr %s239, 16
        %s241 = scalar_lea.vmem [#allocation2], %s240
        // Predicated region
        $region33: #{tpu_custom_call.1} parent=31 // pred_check
          %p242 = pneg %p61
        $region34: #{tpu_custom_call.1} parent=31 // pred_check_branch
          %244 = sbr.rel (%p242) target = $region36
        $region35: #{tpu_custom_call.1} parent=31 // pred_region
          %246 = dma.done %s238, 256
        $region36: #{tpu_custom_call.1} parent=31 // pred_fallthru
          _
        // Predicated region
        $region37: #{tpu_custom_call.1} parent=31 // pred_check
          %p247 = pneg %p87
        $region38: #{tpu_custom_call.1} parent=31 // pred_check_branch
          %249 = sbr.rel (%p247) target = $region40
        $region39: #{tpu_custom_call.1} parent=31 // pred_region
          %251 = dma.done [#allocation6], 16
        $region40: #{tpu_custom_call.1} parent=31 // pred_fallthru
          _
        %s252 = sand.u32 %s48, 1
        %s253 = scalar_lea.sflag [#allocation3], %s252
        %s254 = sand.u32 %s48, 1
        %s255 = smul.addr %s254, 16
        %s256 = scalar_lea.vmem [#allocation2], %s255
        %p257 = pneg %p61
        %p258 = pneg %p58
        %p259 = pneg %p87
        %p260 = pneg %p84
        %p261 = scmp.lt.s32.totalorder %s30, 0
        %s262 = scalar_select %p261, %s30, 0
        %s263 = scalar_lea.vmem %s2, %s262
        %p264 = pneg %p113
        %p265 = pneg %p110
        %p266 = pneg %p141
        %p267 = pneg %p138
        %s268 = sand.u32 %s128, 1
        %s269 = scalar_lea.sflag [#allocation4], %s268
        %s270 = sand.u32 %s128, 1
        %s271 = smul.addr %s270, 16
        %s272 = scalar_lea.vmem [#allocation7], %s271
        %p273 = pneg %p169
        %p274 = pneg %p166
        %s275 = sand.u32 %s156, 1
        %s276 = scalar_lea.sflag [#allocation9], %s275
        %s277 = sand.u32 %s156, 1
        %s278 = smul.addr %s277, 16
        %s279 = scalar_lea.vmem [#allocation8], %s278
        %s280 = smul.u32 2, %s31
        %p281 = scmp.lt.s32.totalorder %s30, 0
        %s282 = scalar_select %p281, %s30, 0
        %s283 = scalar_lea.vmem %s2, %s282
        %s284 = smul.u32 2, %s31
        %s285 = smul.u32 2, %s31
        %v286 = vld [vmem:[%s241] sm:$0xff]
        %v287 = vld [vmem:[%s241 + $0x8] sm:$0xff]
        %v288 = vld [vmem:[#allocation5] sm:$0x1]
        %v289 = vld [vmem:[%s283] sm:$0x1]
        %v291 = vperm.slane %v288, 0
        %v293 = vmul.f32 %v286, %v291
        %v294 = vmul.f32 %v287, %v291
        %295 = vst [vmem:[%s272] sm:$0xff] %v293
        %296 = vst [vmem:[%s272 + $0x8] sm:$0xff] %v294
        %v298 = vperm.slane %v289, 0
        %v300 = vmul.f32 %v286, %v298
        %v301 = vmul.f32 %v287, %v298
        %302 = vst [vmem:[%s279] sm:$0xff] %v300
        %303 = vst [vmem:[%s279 + $0x8] sm:$0xff] %v301
        %s304 = sand.u32 %s128, 1
        %s305 = scalar_lea.sflag [#allocation4], %s304
        %s306 = sand.u32 %s128, 1
        %s307 = smul.addr %s306, 16
        %s308 = scalar_lea.vmem [#allocation7], %s307
        %s309 = sand.u32 %s156, 1
        %s310 = scalar_lea.sflag [#allocation9], %s309
        %s311 = sand.u32 %s156, 1
        %s312 = smul.addr %s311, 16
        %s313 = scalar_lea.vmem [#allocation8], %s312
        // Predicated region
        $region41: #{tpu_custom_call.1} parent=31 // pred_check
          %p314 = pneg %p138
        $region42: #{tpu_custom_call.1} parent=31 // pred_check_branch
          %316 = sbr.rel (%p314) target = $region44
        $region43: #{tpu_custom_call.1} parent=31 // pred_region
          %s317 = smul.u32 2, %s31
          %319 = vsyncadd %s305, 0
          %s320 = sadd.s32 %s30, %s317
          %s321 = smul.addr %s320, 8
          %s322 = scalar_lea.hbm %s3, %s321
          %s323 = sshll.u32 %s308, 4
          %s324 = int_to_ptr.vmem [resolvable:$true] %s323
          %s325 = sshll.u32 %s322, 4
          %s326 = int_to_ptr.hbm [resolvable:$true] %s325
          %331 = dma.vmem_to_hbm [thread:$0]  %s324, 256, %s326, %s305, 128, 128, 8
        $region44: #{tpu_custom_call.1} parent=31 // pred_fallthru
          _
        // Predicated region
        $region45: #{tpu_custom_call.1} parent=31 // pred_check
          %p332 = pneg %p166
        $region46: #{tpu_custom_call.1} parent=31 // pred_check_branch
          %334 = sbr.rel (%p332) target = $region48
        $region47: #{tpu_custom_call.1} parent=31 // pred_region
          %s335 = smul.u32 2, %s31
          %337 = vsyncadd %s310, 0
          %s338 = sadd.s32 %s30, %s335
          %s339 = smul.addr %s338, 8
          %s340 = scalar_lea.hbm %s4, %s339
          %s341 = sshll.u32 %s313, 4
          %s342 = int_to_ptr.vmem [resolvable:$true] %s341
          %s343 = sshll.u32 %s340, 4
          %s344 = int_to_ptr.hbm [resolvable:$true] %s343
          %349 = dma.vmem_to_hbm [thread:$0]  %s342, 256, %s344, %s310, 128, 128, 8
        $region48: #{tpu_custom_call.1} parent=31 // pred_fallthru
          _
      $region32: #{tpu_custom_call.1} parent=5 // pred_fallthru
        _
      %p350 = scmp.le.s32.totalorder 2, %s21
      // Predicated region
      $region49: #{tpu_custom_call.1} parent=5 // pred_check
        %p351 = pneg %p350
      $region50: #{tpu_custom_call.1} parent=5 // pred_check_branch
        %353 = sbr.rel (%p351) target = $region52
      $region51: #{tpu_custom_call.1} parent=5 // pred_region
        %s354 = ssub.s32 %s21, 2
        // Predicated region
        $region53: #{tpu_custom_call.1} parent=51 // pred_check
          %p355 = pneg %p144
        $region54: #{tpu_custom_call.1} parent=51 // pred_check_branch
          %357 = sbr.rel (%p355) target = $region56
        $region55: #{tpu_custom_call.1} parent=51 // pred_region
          %s358 = sand.u32 %s129, 1
          %s359 = scalar_lea.sflag [#allocation4], %s358
          %s360 = sand.u32 %s129, 1
          %s361 = smul.addr %s360, 16
          %s362 = scalar_lea.vmem [#allocation7], %s361
          %364 = dma.done %s359, 256
        $region56: #{tpu_custom_call.1} parent=51 // pred_fallthru
          _
        // Predicated region
        $region57: #{tpu_custom_call.1} parent=51 // pred_check
          %p365 = pneg %p172
        $region58: #{tpu_custom_call.1} parent=51 // pred_check_branch
          %367 = sbr.rel (%p365) target = $region60
        $region59: #{tpu_custom_call.1} parent=51 // pred_region
          %s368 = sand.u32 %s157, 1
          %s369 = scalar_lea.sflag [#allocation9], %s368
          %s370 = sand.u32 %s157, 1
          %s371 = smul.addr %s370, 16
          %s372 = scalar_lea.vmem [#allocation8], %s371
          %374 = dma.done %s369, 256
        $region60: #{tpu_custom_call.1} parent=51 // pred_fallthru
          _
      $region52: #{tpu_custom_call.1} parent=5 // pred_fallthru
        _
    $region6: #{tpu_custom_call.1} parent=1 // loop_footer
      %s25 = sadd.s32 1, %s21
    $region7: #{tpu_custom_call.1} parent=1 // loop_footer_branch
      %20 = sbr.rel target = $region3
    $region8: #{tpu_custom_call.1} parent=1 // loop_exit
      _
    %375 = vsyncpa [#allocation3], 1
    %s376 = scalar_lea.sflag [#allocation3], 1
    %377 = vsyncpa %s376, 1
    %378 = vsyncpa [#allocation6], 1
    %379 = vsyncpa [#allocation4], 1
    %s380 = scalar_lea.sflag [#allocation4], 1
    %381 = vsyncpa %s380, 1
    %382 = vsyncpa [#allocation9], 1
    %s383 = scalar_lea.sflag [#allocation9], 1
    %384 = vsyncpa %s383, 1

</llo_original>
